<compile_context>
chip_gen: v7x
topology: tpu7x:2x2x1
jax: 0.10.0
libtpu: 0.0.40
codegen_flags: <defaults>
</compile_context>

<pallas_src>
import functools
import math

import jax
import jax.numpy as jnp
from jax.experimental import pallas as pl
from jax.experimental.pallas import tpu as pltpu


# ------------------------------------------------------------------ in-kernel helpers

def _layernorm(z, g, b, eps):
    mu = jnp.mean(z, axis=-1, keepdims=True)
    var = jnp.mean((z - mu) ** 2, axis=-1, keepdims=True)
    return (z - mu) * jax.lax.rsqrt(var + eps) * g + b


def _mha_core(q, k, v, nhead, scale, bias):
    # q: (Lq, E), k/v: (Lk, E), bias: (Lq, Lk) additive or None -> (Lq, E)
    E = q.shape[-1]
    dh = E // nhead
    outs = []
    for h in range(nhead):                       # static unroll (nhead is small)
        qh = q[:, h * dh:(h + 1) * dh]
        kh = k[:, h * dh:(h + 1) * dh]
        vh = v[:, h * dh:(h + 1) * dh]
        s = jnp.dot(qh, kh.T, preferred_element_type=jnp.float32) * scale
        if bias is not None:
            s = s + bias
        m = jnp.max(s, axis=-1, keepdims=True)
        p = jnp.exp(s - m)
        p = p * pl.reciprocal(jnp.sum(p, axis=-1, keepdims=True), approx=True)
        outs.append(jnp.dot(p, vh, preferred_element_type=jnp.float32))
    return jnp.concatenate(outs, axis=-1)        # (Lq, E), lane-dense


# ------------------------------------------------------------------ kernels

def _self_attn_block_kernel(*refs, nhead, scale, eps, causal, has_mask):
    # Fused: qkv-proj -> MHA -> out-proj -> residual add -> LayerNorm   (one batch slab)
    if has_mask:
        (x_ref, wqkv_ref, bqkv_ref, wo_ref, bo_ref, g_ref, beta_ref, mask_ref, o_ref) = refs
    else:
        (x_ref, wqkv_ref, bqkv_ref, wo_ref, bo_ref, g_ref, beta_ref, o_ref) = refs
        mask_ref = None

    x = x_ref[0].astype(jnp.float32)             # (L, E)
    L, E = x.shape
    qkv = jnp.dot(x, wqkv_ref[...], preferred_element_type=jnp.float32) + bqkv_ref[...]
    q = qkv[:, 0:E]
    k = qkv[:, E:2 * E]
    v = qkv[:, 2 * E:3 * E]

    bias = None
    if causal:
        row = jax.lax.broadcasted_iota(jnp.int32, (L, L), 0)
        col = jax.lax.broadcasted_iota(jnp.int32, (L, L), 1)
        bias = jnp.where(row >= col, 0.0, -1e9).astype(jnp.float32)
    if has_mask:
        m = mask_ref[...].astype(jnp.float32)
        bias = m if bias is None else bias + m

    attn = _mha_core(q, k, v, nhead, scale, bias)
    y = jnp.dot(attn, wo_ref[...], preferred_element_type=jnp.float32) + bo_ref[...]
    o_ref[0] = _layernorm(x + y, g_ref[...], beta_ref[...], eps).astype(o_ref.dtype)


def _cross_attn_block_kernel(*refs, nhead, scale, eps, has_mask):
    # Fused: q-proj (K/V of memory precomputed & hoisted) -> MHA -> out-proj -> add -> LayerNorm
    if has_mask:
        (x_ref, kv_ref, wq_ref, bq_ref, wo_ref, bo_ref, g_ref, beta_ref, mask_ref, o_ref) = refs
    else:
        (x_ref, kv_ref, wq_ref, bq_ref, wo_ref, bo_ref, g_ref, beta_ref, o_ref) = refs
        mask_ref = None

    x = x_ref[0].astype(jnp.float32)             # (Lq, E)
    kv = kv_ref[0].astype(jnp.float32)           # (Lk, 2E)
    E = x.shape[-1]
    q = jnp.dot(x, wq_ref[...], preferred_element_type=jnp.float32) + bq_ref[...]
    k = kv[:, 0:E]
    v = kv[:, E:2 * E]

    bias = mask_ref[...].astype(jnp.float32) if has_mask else None
    attn = _mha_core(q, k, v, nhead, scale, bias)
    y = jnp.dot(attn, wo_ref[...], preferred_element_type=jnp.float32) + bo_ref[...]
    o_ref[0] = _layernorm(x + y, g_ref[...], beta_ref[...], eps).astype(o_ref.dtype)


def _ffn_block_kernel(x_ref, w1_ref, b1_ref, w2_ref, b2_ref, g_ref, beta_ref, o_ref, *, eps):
    # Fused: w1 -> ReLU -> w2 -> residual add -> LayerNorm
    x = x_ref[0].astype(jnp.float32)             # (L, E)
    h = jnp.maximum(jnp.dot(x, w1_ref[...], preferred_element_type=jnp.float32) + b1_ref[...], 0.0)
    y = jnp.dot(h, w2_ref[...], preferred_element_type=jnp.float32) + b2_ref[...]
    o_ref[0] = _layernorm(x + y, g_ref[...], beta_ref[...], eps).astype(o_ref.dtype)


def _linear3d_kernel(x_ref, w_ref, b_ref, o_ref):
    # y = x @ W + b on one batch slab (used once to hoist memory K/V projection)
    y = jnp.dot(x_ref[0].astype(jnp.float32), w_ref[...],
                preferred_element_type=jnp.float32) + b_ref[...]
    o_ref[0] = y.astype(o_ref.dtype)


def _layernorm_kernel(x_ref, g_ref, b_ref, o_ref, *, eps):
    o_ref[0] = _layernorm(x_ref[0].astype(jnp.float32),
                          g_ref[...], b_ref[...], eps).astype(o_ref.dtype)


# ------------------------------------------------------------------ pallas_call wrappers

_PARALLEL = pltpu.CompilerParams(dimension_semantics=("parallel",))


def _rep(shape):
    return pl.BlockSpec(shape, lambda b: tuple(0 for _ in shape))  # replicated operand


def fused_self_attn_block(x, w_qkv, b_qkv, w_o, b_o, g, beta, nhead,
                          *, causal=False, mask=None, eps=1e-5):
    B, L, E = x.shape
    scale = 1.0 / math.sqrt(E // nhead)
    has_mask = mask is not None
    kernel = functools.partial(_self_attn_block_kernel, nhead=nhead, scale=scale,
                               eps=eps, causal=causal, has_mask=has_mask)
    in_specs = [
        pl.BlockSpec((1, L, E), lambda b: (b, 0, 0)),
        _rep((E, 3 * E)), _rep((1, 3 * E)),
        _rep((E, E)), _rep((1, E)),
        _rep((1, E)), _rep((1, E)),
    ]
    args = [x, w_qkv, b_qkv.reshape(1, 3 * E), w_o, b_o.reshape(1, E),
            g.reshape(1, E), beta.reshape(1, E)]
    if has_mask:
        Lk = mask.shape[-1]
        in_specs.append(_rep((L, Lk)))
        args.append(mask.astype(jnp.float32))
    return pl.pallas_call(
        kernel,
        out_shape=jax.ShapeDtypeStruct((B, L, E), x.dtype),
        grid=(B,),
        in_specs=in_specs,
        out_specs=pl.BlockSpec((1, L, E), lambda b: (b, 0, 0)),
        compiler_params=_PARALLEL,
    )(*args)


def fused_cross_attn_block(x, kv_mem, w_q, b_q, w_o, b_o, g, beta, nhead,
                           *, mask=None, eps=1e-5):
    B, Lq, E = x.shape
    Lk = kv_mem.shape[1]
    scale = 1.0 / math.sqrt(E // nhead)
    has_mask = mask is not None
    kernel = functools.partial(_cross_attn_block_kernel, nhead=nhead, scale=scale,
                               eps=eps, has_mask=has_mask)
    in_specs = [
        pl.BlockSpec((1, Lq, E), lambda b: (b, 0, 0)),
        pl.BlockSpec((1, Lk, 2 * E), lambda b: (b, 0, 0)),
        _rep((E, E)), _rep((1, E)),
        _rep((E, E)), _rep((1, E)),
        _rep((1, E)), _rep((1, E)),
    ]
    args = [x, kv_mem, w_q, b_q.reshape(1, E), w_o, b_o.reshape(1, E),
            g.reshape(1, E), beta.reshape(1, E)]
    if has_mask:
        in_specs.append(_rep((Lq, Lk)))
        args.append(mask.astype(jnp.float32))
    return pl.pallas_call(
        kernel,
        out_shape=jax.ShapeDtypeStruct((B, Lq, E), x.dtype),
        grid=(B,),
        in_specs=in_specs,
        out_specs=pl.BlockSpec((1, Lq, E), lambda b: (b, 0, 0)),
        compiler_params=_PARALLEL,
    )(*args)


def fused_ffn_block(x, w1, b1, w2, b2, g, beta, eps=1e-5):
    B, L, E = x.shape
    FF = w1.shape[1]
    kernel = functools.partial(_ffn_block_kernel, eps=eps)
    return pl.pallas_call(
        kernel,
        out_shape=jax.ShapeDtypeStruct((B, L, E), x.dtype),
        grid=(B,),
        in_specs=[
            pl.BlockSpec((1, L, E), lambda b: (b, 0, 0)),
            _rep((E, FF)), _rep((1, FF)),
            _rep((FF, E)), _rep((1, E)),
            _rep((1, E)), _rep((1, E)),
        ],
        out_specs=pl.BlockSpec((1, L, E), lambda b: (b, 0, 0)),
        compiler_params=_PARALLEL,
    )(x, w1, b1.reshape(1, FF), w2, b2.reshape(1, E), g.reshape(1, E), beta.reshape(1, E))


def pallas_batched_linear(x, w, b):
    B, L, E = x.shape
    M = w.shape[1]
    return pl.pallas_call(
        _linear3d_kernel,
        out_shape=jax.ShapeDtypeStruct((B, L, M), x.dtype),
        grid=(B,),
        in_specs=[pl.BlockSpec((1, L, E), lambda i: (i, 0, 0)),
                  _rep((E, M)), _rep((1, M))],
        out_specs=pl.BlockSpec((1, L, M), lambda i: (i, 0, 0)),
        compiler_params=_PARALLEL,
    )(x, w, b.reshape(1, M))


def pallas_layernorm(x, g, b, eps=1e-5):
    B, L, E = x.shape
    kernel = functools.partial(_layernorm_kernel, eps=eps)
    return pl.pallas_call(
        kernel,
        out_shape=jax.ShapeDtypeStruct((B, L, E), x.dtype),
        grid=(B,),
        in_specs=[pl.BlockSpec((1, L, E), lambda i: (i, 0, 0)),
                  _rep((1, E)), _rep((1, E))],
        out_specs=pl.BlockSpec((1, L, E), lambda i: (i, 0, 0)),
        compiler_params=_PARALLEL,
    )(x, g.reshape(1, E), b.reshape(1, E))


# ------------------------------------------------------------------ model glue

def transformer_decoder(tgt, memory, layer_params, num_layers, nhead,
                        tgt_mask=None, memory_mask=None, tgt_is_causal=True,
                        final_norm=None):
    # Matches PyTorch TransformerDecoder.forward with cloned (identical) layer params.
    # tgt: (T, B, E), memory: (S, B, E)  (seq-major, batch_first=False).
    x = jnp.transpose(tgt, (1, 0, 2))        # (B, T, E)  -- one layout transpose total
    mem = jnp.transpose(memory, (1, 0, 2))   # (B, S, E)

    sa = layer_params["self_attn"]
    ca = layer_params["cross_attn"]

    # Fused in-projection weights (built once).
    w_qkv = jnp.concatenate([sa["wq"], sa["wk"], sa["wv"]], axis=1)     # (E, 3E)
    b_qkv = jnp.concatenate([sa["bq"], sa["bk"], sa["bv"]])             # (3E,)
    w_kv = jnp.concatenate([ca["wk"], ca["wv"]], axis=1)                # (E, 2E)
    b_kv = jnp.concatenate([ca["bk"], ca["bv"]])                        # (2E,)

    # Hoisted cross-attn K/V of memory: identical for every cloned layer.
    kv_mem = pallas_batched_linear(mem, w_kv, b_kv)                     # (B, S, 2E)

    for _ in range(num_layers):
        x = fused_self_attn_block(x, w_qkv, b_qkv, sa["wo"], sa["bo"],
                                  layer_params["ln1_g"], layer_params["ln1_b"],
                                  nhead, causal=tgt_is_causal, mask=tgt_mask)
        x = fused_cross_attn_block(x, kv_mem, ca["wq"], ca["bq"], ca["wo"], ca["bo"],
                                   layer_params["ln2_g"], layer_params["ln2_b"],
                                   nhead, mask=memory_mask)
        x = fused_ffn_block(x, layer_params["w1"], layer_params["b1"],
                            layer_params["w2"], layer_params["b2"],
                            layer_params["ln3_g"], layer_params["ln3_b"])

    if final_norm is not None:
        x = pallas_layernorm(x, final_norm["g"], final_norm["b"])

    return jnp.transpose(x, (1, 0, 2))       # back to (T, B, E)


# ------------------------------------------------------------------ params / main

def make_params(key, d_model, dim_ff):
    ks = jax.random.split(key, 16)
    s = 1.0 / math.sqrt(d_model)

    def attn_params(k0):
        kk = jax.random.split(k0, 4)
        return dict(
            wq=jax.random.normal(kk[0], (d_model, d_model), jnp.float32) * s,
            wk=jax.random.normal(kk[1], (d_model, d_model), jnp.float32) * s,
            wv=jax.random.normal(kk[2], (d_model, d_model), jnp.float32) * s,
            wo=jax.random.normal(kk[3], (d_model, d_model), jnp.float32) * s,
            bq=jnp.zeros((d_model,), jnp.float32),
            bk=jnp.zeros((d_model,), jnp.float32),
            bv=jnp.zeros((d_model,), jnp.float32),
            bo=jnp.zeros((d_model,), jnp.float32),
        )

    return dict(
        self_attn=attn_params(ks[0]),
        cross_attn=attn_params(ks[4]),
        w1=jax.random.normal(ks[8], (d_model, dim_ff), jnp.float32) * s,
        b1=jnp.zeros((dim_ff,), jnp.float32),
        w2=jax.random.normal(ks[9], (dim_ff, d_model), jnp.float32) / math.sqrt(dim_ff),
        b2=jnp.zeros((d_model,), jnp.float32),
        ln1_g=jnp.ones((d_model,), jnp.float32), ln1_b=jnp.zeros((d_model,), jnp.float32),
        ln2_g=jnp.ones((d_model,), jnp.float32), ln2_b=jnp.zeros((d_model,), jnp.float32),
        ln3_g=jnp.ones((d_model,), jnp.float32), ln3_b=jnp.zeros((d_model,), jnp.float32),
    )


if __name__ == "__main__":
    T, S, B, E, NHEAD, FF, NLAYERS = 8, 8, 2, 32, 4, 64, 2

    key = jax.random.PRNGKey(0)
    k_tgt, k_mem, k_par = jax.random.split(key, 3)
    tgt = jax.random.normal(k_tgt, (T, B, E), jnp.float32)      # (seq, batch, d_model)
    memory = jax.random.normal(k_mem, (S, B, E), jnp.float32)

    layer_params = make_params(k_par, E, FF)                    # shared by all cloned layers
    final_norm = dict(g=jnp.ones((E,), jnp.float32), b=jnp.zeros((E,), jnp.float32))

    # Causal target mask generated in-kernel (tgt_is_causal=True); no memory mask.
    # TODO(synk): tgt_key_padding_mask / memory_key_padding_mask not exercised (None in this example).
    out = transformer_decoder(tgt, memory, layer_params, NLAYERS, NHEAD,
                              tgt_mask=None, memory_mask=None, tgt_is_causal=True,
                              final_norm=final_norm)
    jax.block_until_ready(out)
    assert out.shape == (T, B, E)
    print("KERNEL_OK")
</pallas_src>

<mosaic_0001>
module attributes {stable_mosaic.version = 11 : i64} {
  func.func @_linear3d_kernel(%arg0: i32, %arg1: memref<1x8x32xf32, #tpu.memory_space<vmem>>, %arg2: memref<32x64xf32, #tpu.memory_space<vmem>>, %arg3: memref<1x64xf32, #tpu.memory_space<vmem>>, %arg4: memref<1x8x64xf32, #tpu.memory_space<vmem>>) attributes {dimension_semantics = [#tpu.dimension_semantics<parallel>], iteration_bounds = array<i64: 2>, scalar_prefetch = 0 : i64, scratch_operands = 0 : i64, tpu.core_type = #tpu.core_type<tc>, window_params = [{transform_indices = @transform_0, window_bounds = array<i64: 1, 8, 32>}, {pipeline_mode = #tpu.pipeline_mode<synchronous>, transform_indices = @transform_1, window_bounds = array<i64: 32, 64>}, {pipeline_mode = #tpu.pipeline_mode<synchronous>, transform_indices = @transform_2, window_bounds = array<i64: 1, 64>}, {transform_indices = @transform_3, window_bounds = array<i64: 1, 8, 64>}]} {
    %c0 = arith.constant 0 : index
    %c0_0 = arith.constant 0 : index
    %c0_1 = arith.constant 0 : index
    %0 = vector.load %arg1[%c0, %c0_0, %c0_1] : memref<1x8x32xf32, #tpu.memory_space<vmem>>, vector<1x8x32xf32>
    %1 = vector.shape_cast %0 : vector<1x8x32xf32> to vector<8x32xf32>
    %c0_2 = arith.constant 0 : index
    %c0_3 = arith.constant 0 : index
    %2 = vector.load %arg2[%c0_2, %c0_3] : memref<32x64xf32, #tpu.memory_space<vmem>>, vector<32x64xf32>
    %cst = arith.constant dense<0.000000e+00> : vector<8x64xf32>
    %3 = tpu.matmul %1, %2, %cst {dimension_numbers = #tpu.dot_dimension_numbers<[1], [0], [0], [1], [0, 0, 1, 1], [], []>} : vector<8x32xf32>, vector<32x64xf32>, vector<8x64xf32> -> vector<8x64xf32>
    %c0_4 = arith.constant 0 : index
    %c0_5 = arith.constant 0 : index
    %4 = vector.load %arg3[%c0_4, %c0_5] : memref<1x64xf32, #tpu.memory_space<vmem>>, vector<1x64xf32>
    %5 = vector.broadcast %4 : vector<1x64xf32> to vector<8x64xf32>
    %6 = arith.addf %3, %5 : vector<8x64xf32>
    %c0_6 = arith.constant 0 : index
    %c0_7 = arith.constant 0 : index
    %c0_8 = arith.constant 0 : index
    %7 = vector.load %arg4[%c0_6, %c0_7, %c0_8] : memref<1x8x64xf32, #tpu.memory_space<vmem>>, vector<1x8x64xf32>
    %8 = vector.shape_cast %7 : vector<1x8x64xf32> to vector<8x64xf32>
    %9 = vector.shape_cast %6 : vector<8x64xf32> to vector<1x8x64xf32>
    tpu.vector_store %arg4[%c0_6, %c0_7, %c0_8], %9 {strides = array<i32>} : memref<1x8x64xf32, #tpu.memory_space<vmem>>, vector<1x8x64xf32>,
    return
  }
  func.func @transform_0(%arg0: i32) -> (i32, i32, i32) {
    %c0_i32 = arith.constant 0 : i32
    %c0_i32_0 = arith.constant 0 : i32
    %c0_i32_1 = arith.constant 0 : i32
    return %arg0, %c0_i32, %c0_i32_0 : i32, i32, i32
  }
  func.func @transform_1(%arg0: i32) -> (i32, i32) {
    %c0_i32 = arith.constant 0 : i32
    %c0_i32_0 = arith.constant 0 : i32
    %c0_i32_1 = arith.constant 0 : i32
    return %c0_i32, %c0_i32_0 : i32, i32
  }
  func.func @transform_2(%arg0: i32) -> (i32, i32) {
    %c0_i32 = arith.constant 0 : i32
    %c0_i32_0 = arith.constant 0 : i32
    %c0_i32_1 = arith.constant 0 : i32
    return %c0_i32, %c0_i32_0 : i32, i32
  }
  func.func @transform_3(%arg0: i32) -> (i32, i32, i32) {
    %c0_i32 = arith.constant 0 : i32
    %c0_i32_0 = arith.constant 0 : i32
    %c0_i32_1 = arith.constant 0 : i32
    return %arg0, %c0_i32, %c0_i32_0 : i32, i32, i32
  }
}

</mosaic_0001>

<llo_original>
// kernel: tpu_custom_call.1
$region0: #{tpu_custom_call.1}
  #allocation0 [shape = 'u32[]', space=smem, size = 0x4, offset = 0x4, fixed_abs, tag = 'smem constant byte address 0x4 - core index']
  #allocation1 [shape = 'u32[144,128]{1,0:T(1,128)}', space=vmem, size = 0x12000, scoped, tag = 'internal scratch']
  %s0 = inlined_call_operand.hbm [shape: f32[2,8,32], index: 0, kind: input, shape index: {}]
  %s1 = inlined_call_operand.hbm [shape: f32[32,64], index: 1, kind: input, shape index: {}]
  %s2 = inlined_call_operand.vmem [shape: f32[1,64], index: 2, kind: input, shape index: {}]
  %s3 = inlined_call_operand.hbm [shape: f32[2,8,64], index: 3, kind: output, shape index: {}]
  %s4 = sld [smem:[#allocation0]]
  $region53: #{tpu_custom_call.1} parent=0
    _
  %s6 = ssub.s32 1, %s4
  %s7 = scalar_select 0, %s6, %s4
  $region1: #{tpu_custom_call.1} parent=0
    #allocation2 [shape = 'u8[8192]{0}', space=vmem, size = 0x2000, scoped, tag = 'input window, operand 0']
    #allocation3 [shape = 's32[2]{0}', space=sflag, size = 0x8, scoped, tag = 'scoped memory for tpu_custom_call.1']
    #allocation4 [shape = 's32[2]{0}', space=sflag, size = 0x8, scoped, tag = 'scoped memory for tpu_custom_call.1']
    #allocation5 [shape = 'u8[16384]{0}', space=vmem, size = 0x4000, scoped, tag = 'input window, operand 1, single buffered']
    #allocation6 [shape = 's32[1]{0}', space=sflag, size = 0x4, scoped, tag = 'scoped memory for tpu_custom_call.1']
    #allocation7 [shape = 'u8[8192]{0}', space=vmem, size = 0x2000, scoped, tag = 'output window, operand 0']
    %8 = vsyncpa [#allocation3], 0
    %s9 = scalar_lea.sflag [#allocation3], 1
    %10 = vsyncpa %s9, 0
    %11 = vsyncpa [#allocation6], 0
    %12 = vsyncpa [#allocation4], 0
    %s13 = scalar_lea.sflag [#allocation4], 1
    %14 = vsyncpa %s13, 0
    loop: start=0, step=1, limit=4
    $region2: #{tpu_custom_call.1} parent=1 // loop_pre_header
      _
    $region3: #{tpu_custom_call.1} parent=1 // loop_header
      %s16 = sphi 0, %s20
      %p17 = scmp.ge.s32.totalorder %s16, 4
      %s26 = sphi 0, %s28
      %s29 = sphi 0, %s26
      %s30 = sphi 0, %s29
      %s46 = sphi 0, %s30
      %s50 = sphi 0, %s50
      %s52 = sphi 0, %s50
      %s53 = sphi 0, %s52
      %s67 = sphi 0, %s53
      %s71 = sphi 0, %s71
      %s73 = sphi 0, %s71
      %s74 = sphi 0, %s73
      %s88 = sphi 0, %s74
      %s94 = sphi 0, %s96
      %s97 = sphi 0, %s94
      %s98 = sphi 0, %s97
      %s114 = sphi 0, %s98
    $region4: #{tpu_custom_call.1} parent=1 // loop_header_branch
      %19 = sbr.rel (%p17) target = $region8
    $region5: #{tpu_custom_call.1} parent=1 // loop_body
      %s21 = ssub.s32 %s16, 1
      %s22 = ssub.s32 %s16, 2
      %s23 = sadd.s32 %s16, 1
      %s24 = ssub.s32 %s16, %s23
      %p25 = scmp.eq.s32.totalorder %s24, 0
      %s27 = sadd.s32 %s26, 1
      %s28 = scalar_select %p25, %s26, %s27
      %p31 = pneg %p25
      %p32 = scmp.eq.s32.totalorder %s16, 1
      %p33 = por %p31, %p32
      %p34 = scmp.ne.s32.totalorder %s26, %s29
      %p35 = scmp.eq.s32.totalorder %s16, 0
      %p36 = por %p34, %p35
      %p37 = scmp.ne.s32.totalorder %s26, %s29
      %p38 = scmp.eq.s32.totalorder %s21, 1
      %p39 = por %p37, %p38
      %p40 = scmp.ne.s32.totalorder %s29, %s30
      %p41 = scmp.eq.s32.totalorder %s21, 0
      %p42 = por %p40, %p41
      %p43 = scmp.ne.s32.totalorder %s29, %s30
      %p44 = scmp.eq.s32.totalorder %s22, 1
      %p45 = por %p43, %p44
      %p47 = scmp.ne.s32.totalorder %s30, %s46
      %p48 = scmp.eq.s32.totalorder %s22, 0
      %p49 = por %p47, %p48
      %s51 = sadd.s32 %s50, 1
      %p54 = scmp.eq.s32.totalorder %s16, 1
      %p55 = scmp.ne.s32.totalorder %s50, %s52
      %p56 = scmp.eq.s32.totalorder %s16, 0
      %p57 = por %p55, %p56
      %p58 = scmp.ne.s32.totalorder %s50, %s52
      %p59 = scmp.eq.s32.totalorder %s21, 1
      %p60 = por %p58, %p59
      %p61 = scmp.ne.s32.totalorder %s52, %s53
      %p62 = scmp.eq.s32.totalorder %s21, 0
      %p63 = por %p61, %p62
      %p64 = scmp.ne.s32.totalorder %s52, %s53
      %p65 = scmp.eq.s32.totalorder %s22, 1
      %p66 = por %p64, %p65
      %p68 = scmp.ne.s32.totalorder %s53, %s67
      %p69 = scmp.eq.s32.totalorder %s22, 0
      %p70 = por %p68, %p69
      %s72 = sadd.s32 %s71, 1
      %p75 = scmp.eq.s32.totalorder %s16, 1
      %p76 = scmp.ne.s32.totalorder %s71, %s73
      %p77 = scmp.eq.s32.totalorder %s16, 0
      %p78 = por %p76, %p77
      %p79 = scmp.ne.s32.totalorder %s71, %s73
      %p80 = scmp.eq.s32.totalorder %s21, 1
      %p81 = por %p79, %p80
      %p82 = scmp.ne.s32.totalorder %s73, %s74
      %p83 = scmp.eq.s32.totalorder %s21, 0
      %p84 = por %p82, %p83
      %p85 = scmp.ne.s32.totalorder %s73, %s74
      %p86 = scmp.eq.s32.totalorder %s22, 1
      %p87 = por %p85, %p86
      %p89 = scmp.ne.s32.totalorder %s74, %s88
      %p90 = scmp.eq.s32.totalorder %s22, 0
      %p91 = por %p89, %p90
      %s92 = ssub.s32 %s16, %s23
      %p93 = scmp.eq.s32.totalorder %s92, 0
      %s95 = sadd.s32 %s94, 1
      %s96 = scalar_select %p93, %s94, %s95
      %p99 = pneg %p93
      %p100 = scmp.eq.s32.totalorder %s16, 1
      %p101 = por %p99, %p100
      %p102 = scmp.ne.s32.totalorder %s94, %s97
      %p103 = scmp.eq.s32.totalorder %s16, 0
      %p104 = por %p102, %p103
      %p105 = scmp.ne.s32.totalorder %s94, %s97
      %p106 = scmp.eq.s32.totalorder %s21, 1
      %p107 = por %p105, %p106
      %p108 = scmp.ne.s32.totalorder %s97, %s98
      %p109 = scmp.eq.s32.totalorder %s21, 0
      %p110 = por %p108, %p109
      %p111 = scmp.ne.s32.totalorder %s97, %s98
      %p112 = scmp.eq.s32.totalorder %s22, 1
      %p113 = por %p111, %p112
      %p115 = scmp.ne.s32.totalorder %s98, %s114
      %p116 = scmp.eq.s32.totalorder %s22, 0
      %p117 = por %p115, %p116
      %p118 = scmp.le.s32.totalorder 1, %s16
      %p119 = scmp.lt.s32.totalorder %s16, 3
      %p120 = pnand %p118, %p119
      %p121 = pneg %p120
      // Predicated region
      $region9: #{tpu_custom_call.1} parent=5 // pred_check
        _
      $region10: #{tpu_custom_call.1} parent=5 // pred_check_branch
        %123 = sbr.rel (%p120) target = $region12
      $region11: #{tpu_custom_call.1} parent=5 // pred_region
        %s124 = ssub.s32 %s16, 1
        // Predicated region
        $region13: #{tpu_custom_call.1} parent=11 // pred_check
          %p125 = pneg %p63
        $region14: #{tpu_custom_call.1} parent=11 // pred_check_branch
          %127 = sbr.rel (%p125) target = $region16
        $region15: #{tpu_custom_call.1} parent=11 // pred_region
          %s129 = ssub.s32 512, 512
          %130 = vsyncadd [#allocation6], %s129
          %s131 = sshll.u32 [#allocation5], 4
          %s132 = int_to_ptr.vmem [resolvable:$true] %s131
          %137 = dma.hbm_to_vmem [thread:$0]  %s1, 512, %s132, [#allocation6], 128, 128, 8
        $region16: #{tpu_custom_call.1} parent=11 // pred_fallthru
          _
        // Predicated region
        $region17: #{tpu_custom_call.1} parent=11 // pred_check
          %p138 = pneg %p84
        $region18: #{tpu_custom_call.1} parent=11 // pred_check_branch
          %140 = sbr.rel (%p138) target = $region20
        $region19: #{tpu_custom_call.1} parent=11 // pred_region
          _
        $region20: #{tpu_custom_call.1} parent=11 // pred_fallthru
          _
      $region12: #{tpu_custom_call.1} parent=5 // pred_fallthru
        _
      %p141 = scmp.lt.s32.totalorder %s16, 2
      // Predicated region
      $region21: #{tpu_custom_call.1} parent=5 // pred_check
        %p142 = pneg %p141
      $region22: #{tpu_custom_call.1} parent=5 // pred_check_branch
        %144 = sbr.rel (%p142) target = $region24
      $region23: #{tpu_custom_call.1} parent=5 // pred_region
        // Predicated region
        $region25: #{tpu_custom_call.1} parent=23 // pred_check
          %p145 = pneg %p36
        $region26: #{tpu_custom_call.1} parent=23 // pred_check_branch
          %147 = sbr.rel (%p145) target = $region28
        $region27: #{tpu_custom_call.1} parent=23 // pred_region
          %s148 = sand.u32 %s26, 1
          %s149 = scalar_lea.sflag [#allocation3], %s148
          %s150 = sand.u32 %s26, 1
          %s151 = smul.addr %s150, 8
          %s152 = scalar_lea.vmem [#allocation2], %s151
          %s154 = ssub.s32 128, 128
          %155 = vsyncadd %s149, %s154
          %s156 = smul.addr %s16, 128
          %s157 = scalar_lea.hbm %s0, %s156
          %s159 = sshll.u32 %s152, 4
          %s160 = int_to_ptr.vmem [resolvable:$true] %s159
          %162 = dma.hbm_to_vmem [thread:$0]  %s157, 128, %s160, %s149
        $region28: #{tpu_custom_call.1} parent=23 // pred_fallthru
          _
      $region24: #{tpu_custom_call.1} parent=5 // pred_fallthru
        _
      %p163 = scmp.le.s32.totalorder 1, %s16
      %p164 = scmp.lt.s32.totalorder %s16, 3
      %p165 = pnand %p163, %p164
      %p166 = pneg %p165
      // Predicated region
      $region29: #{tpu_custom_call.1} parent=5 // pred_check
        _
      $region30: #{tpu_custom_call.1} parent=5 // pred_check_branch
        %168 = sbr.rel (%p165) target = $region32
      $region31: #{tpu_custom_call.1} parent=5 // pred_region
        %s169 = ssub.s32 %s16, 1
        %s170 = sand.u32 %s29, 1
        %s171 = scalar_lea.sflag [#allocation3], %s170
        %s172 = sand.u32 %s29, 1
        %s173 = smul.addr %s172, 8
        %s174 = scalar_lea.vmem [#allocation2], %s173
        // Predicated region
        $region33: #{tpu_custom_call.1} parent=31 // pred_check
          %p175 = pneg %p42
        $region34: #{tpu_custom_call.1} parent=31 // pred_check_branch
          %177 = sbr.rel (%p175) target = $region36
        $region35: #{tpu_custom_call.1} parent=31 // pred_region
          %178 = dma.done %s171, 128
        $region36: #{tpu_custom_call.1} parent=31 // pred_fallthru
          _
        // Predicated region
        $region37: #{tpu_custom_call.1} parent=31 // pred_check
          %p179 = pneg %p63
        $region38: #{tpu_custom_call.1} parent=31 // pred_check_branch
          %181 = sbr.rel (%p179) target = $region40
        $region39: #{tpu_custom_call.1} parent=31 // pred_region
          %182 = dma.done [#allocation6], 512
        $region40: #{tpu_custom_call.1} parent=31 // pred_fallthru
          _
        %s183 = sand.u32 %s29, 1
        %s184 = scalar_lea.sflag [#allocation3], %s183
        %s185 = sand.u32 %s29, 1
        %s186 = smul.addr %s185, 8
        %s187 = scalar_lea.vmem [#allocation2], %s186
        %p188 = pneg %p42
        %p189 = pneg %p39
        %p190 = pneg %p63
        %p191 = pneg %p60
        %p192 = pneg %p84
        %p193 = pneg %p81
        %p194 = pneg %p110
        %p195 = pneg %p107
        %s196 = sand.u32 %s97, 1
        %s197 = scalar_lea.sflag [#allocation4], %s196
        %s198 = sand.u32 %s97, 1
        %s199 = smul.addr %s198, 8
        %s200 = scalar_lea.vmem [#allocation7], %s199
        %v201 = vld [vmem:[%s174] sm:$0xff]
        %v202 = vld [vmem:[#allocation5] sm:$0xff]
        %v203 = vld [vmem:[#allocation5 + $0x8] sm:$0xff]
        %v204 = vld [vmem:[#allocation5 + $0x10] sm:$0xff]
        %v205 = vld [vmem:[#allocation5 + $0x18] sm:$0xff]
        %v206 = vld [vmem:[%s2] sm:$0x1]
        %v208 = vlaneseq
        %v209 = vshrl.u32 %v208, 7
        %v210 = vsub.s32 0, %v209
        %v211 = vrot.slane %v206, %v210
        %vm213 = vcmask 261120
        %v215 = vsel %vm213, %v201, 0
        %217 = vmatprep.subr.mxu0 0.0
        %218 = vmatpush1.msra.mxu0 %v202
        %219 = vmatprep.subr.mxu0 0.0
        %220 = vmatpush1.msra.mxu0 %v203
        %221 = vmatprep.subr.mxu0 0.0
        %222 = vmatpush1.msra.mxu0 %v204
        %223 = vmatprep.subr.mxu0 0.0
        %224 = vmatpush1.msra.mxu0 %v205
        %225 = vmatprep.subr.mxu0 0.0
        %226 = vmatpush1.msra.mxu0 0.0
        %227 = vmatprep.subr.mxu0 0.0
        %228 = vmatpush1.msra.mxu0 0.0
        %229 = vmatprep.subr.mxu0 0.0
        %230 = vmatpush1.msra.mxu0 0.0
        %231 = vmatprep.subr.mxu0 0.0
        %232 = vmatpush1.msra.mxu0 0.0
        %233 = vmatprep.subr.mxu0 0.0
        %234 = vmatpush1.msra.mxu0 0.0
        %235 = vmatprep.subr.mxu0 0.0
        %236 = vmatpush1.msra.mxu0 0.0
        %237 = vmatprep.subr.mxu0 0.0
        %238 = vmatpush1.msra.mxu0 0.0
        %239 = vmatprep.subr.mxu0 0.0
        %240 = vmatpush1.msra.mxu0 0.0
        %241 = vmatprep.subr.mxu0 0.0
        %242 = vmatpush1.msra.mxu0 0.0
        %243 = vmatprep.subr.mxu0 0.0
        %244 = vmatpush1.msra.mxu0 0.0
        %245 = vmatprep.subr.mxu0 0.0
        %246 = vmatpush1.msra.mxu0 0.0
        %247 = vmatprep.subr.mxu0 0.0
        %248 = vmatpush1.msra.mxu0 0.0
        %249 = vmatprep.subr.mxu0 0.0
        %250 = vmatpush1.msra.mxu0 0.0
        %251 = vmatprep.subr.mxu0 0.0
        %252 = vmatpush1.msra.mxu0 0.0
        %253 = vmatprep.subr.mxu0 0.0
        %254 = vmatpush1.msra.mxu0 0.0
        %255 = vmatprep.subr.mxu0 0.0
        %256 = vmatpush1.msra.mxu0 0.0
        %257 = vmatprep.subr.mxu0 0.0
        %258 = vmatpush1.msra.mxu0 0.0
        %259 = vmatprep.subr.mxu0 0.0
        %260 = vmatpush1.msra.mxu0 0.0
        %261 = vmatprep.subr.mxu0 0.0
        %262 = vmatpush1.msra.mxu0 0.0
        %263 = vmatprep.subr.mxu0 0.0
        %264 = vmatpush1.msra.mxu0 0.0
        %265 = vmatprep.subr.mxu0 0.0
        %266 = vmatpush1.msra.mxu0 0.0
        %267 = vmatprep.subr.mxu0 0.0
        %268 = vmatpush1.msra.mxu0 0.0
        %269 = vmatprep.subr.mxu0 0.0
        %270 = vmatpush1.msra.mxu0 0.0
        %271 = vmatprep.subr.mxu0 0.0
        %272 = vmatpush1.msra.mxu0 0.0
        %273 = vmatprep.subr.mxu0 0.0
        %274 = vmatpush1.msra.mxu0 0.0
        %275 = vmatprep.subr.mxu0 0.0
        %276 = vmatpush1.msra.mxu0 0.0
        %277 = vmatprep.subr.mxu0 0.0
        %278 = vmatpush1.msra.mxu0 0.0
        %279 = vmatprep.subr.mxu0 0.0
        %280 = vmatpush1.msra.mxu0 0.0
        %281 = vmatprep.mubr.f32.mxu0 0.0
        %282 = vmatmul.mubr.f32.gmra.mrb[0].mxu0 %v215
        %v283 = vpop.f32.mrb[0].mxu0
        %v284 = vadd.f32 %v211, %v283
        %v285 = vpop.f32.mrb[0].mxu0
        %286 = vdwg.mxu0
        %vm287 = vcmask 523264
        %288 = vst.msk [vmem:[%s200] sm:$0xff] %vm287, %v284
        %s289 = sand.u32 %s97, 1
        %s290 = scalar_lea.sflag [#allocation4], %s289
        %s291 = sand.u32 %s97, 1
        %s292 = smul.addr %s291, 8
        %s293 = scalar_lea.vmem [#allocation7], %s292
        // Predicated region
        $region41: #{tpu_custom_call.1} parent=31 // pred_check
          %p294 = pneg %p107
        $region42: #{tpu_custom_call.1} parent=31 // pred_check_branch
          %296 = sbr.rel (%p294) target = $region44
        $region43: #{tpu_custom_call.1} parent=31 // pred_region
          %s298 = ssub.s32 128, 128
          %299 = vsyncadd %s290, %s298
          %s300 = smul.addr %s21, 128
          %s301 = scalar_lea.hbm %s3, %s300
          %s303 = sshll.u32 %s293, 4
          %s304 = int_to_ptr.vmem [resolvable:$true] %s303
          %306 = dma.vmem_to_hbm [thread:$0]  %s304, 128, %s301, %s290
        $region44: #{tpu_custom_call.1} parent=31 // pred_fallthru
          _
      $region32: #{tpu_custom_call.1} parent=5 // pred_fallthru
        _
      %p307 = scmp.le.s32.totalorder 2, %s16
      // Predicated region
      $region45: #{tpu_custom_call.1} parent=5 // pred_check
        %p308 = pneg %p307
      $region46: #{tpu_custom_call.1} parent=5 // pred_check_branch
        %310 = sbr.rel (%p308) target = $region48
      $region47: #{tpu_custom_call.1} parent=5 // pred_region
        %s311 = ssub.s32 %s16, 2
        // Predicated region
        $region49: #{tpu_custom_call.1} parent=47 // pred_check
          %p312 = pneg %p113
        $region50: #{tpu_custom_call.1} parent=47 // pred_check_branch
          %314 = sbr.rel (%p312) target = $region52
        $region51: #{tpu_custom_call.1} parent=47 // pred_region
          %s315 = sand.u32 %s98, 1
          %s316 = scalar_lea.sflag [#allocation4], %s315
          %s317 = sand.u32 %s98, 1
          %s318 = smul.addr %s317, 8
          %s319 = scalar_lea.vmem [#allocation7], %s318
          %320 = dma.done %s316, 128
        $region52: #{tpu_custom_call.1} parent=47 // pred_fallthru
          _
      $region48: #{tpu_custom_call.1} parent=5 // pred_fallthru
        _
    $region6: #{tpu_custom_call.1} parent=1 // loop_footer
      %s20 = sadd.s32 1, %s16
    $region7: #{tpu_custom_call.1} parent=1 // loop_footer_branch
      %15 = sbr.rel target = $region3
    $region8: #{tpu_custom_call.1} parent=1 // loop_exit
      _
    %321 = vsyncpa [#allocation3], 1
    %s322 = scalar_lea.sflag [#allocation3], 1
    %323 = vsyncpa %s322, 1
    %324 = vsyncpa [#allocation6], 1
    %325 = vsyncpa [#allocation4], 1
    %s326 = scalar_lea.sflag [#allocation4], 1
    %327 = vsyncpa %s326, 1

</llo_original>
